<compile_context>
chip_gen: v7x
topology: tpu7x:2x2x1
jax: 0.10.0
libtpu: 0.0.40
codegen_flags: <defaults>
</compile_context>

<pallas_src>
import functools

import jax
import jax.numpy as jnp
from jax.experimental import pallas as pl
from jax.experimental.pallas import tpu as pltpu


def _round_up(x, m):
    return (x + m - 1) // m * m


def _qwen2_mlp_kernel(x_ref, wgu_ref, wd_ref, o_ref, acc_ref, *, ti):
    j = pl.program_id(1)

    @pl.when(j == 0)
    def _():
        acc_ref[...] = jnp.zeros_like(acc_ref)

    x = x_ref[...]
    # One wide MXU matmul for both gate and up: wgu block is [gate_j | up_j].
    gu = jnp.dot(x, wgu_ref[...], preferred_element_type=jnp.float32)
    g = gu[:, :ti]
    u = gu[:, ti:]
    # SiLU(g) * u  (hidden_act == "silu" for Qwen2)
    h = (g * jax.nn.sigmoid(g)) * u
    # Partial down projection, accumulated over the intermediate axis.
    acc_ref[...] += jnp.dot(h.astype(wd_ref.dtype), wd_ref[...],
                            preferred_element_type=jnp.float32)

    @pl.when(j == pl.num_programs(1) - 1)
    def _():
        o_ref[...] = acc_ref[...].astype(o_ref.dtype)


@functools.partial(jax.jit, static_argnames=("tm", "ti"))
def qwen2_mlp(x, w_gate, w_up, w_down, *, tm=256, ti=512):
    """x: (B, S, H); w_gate/w_up: (H, I); w_down: (I, H) -> (B, S, H)."""
    B, S, H = x.shape
    I = w_gate.shape[1]
    M = B * S
    x2 = x.reshape(M, H)

    # Effective tile sizes: clipped to the (padded) problem and hardware-aligned
    # (sublane multiple of 8 for M, lane multiple of 128 for the intermediate).
    tm_eff = _round_up(min(tm, _round_up(M, 8)), 8)
    ti_eff = _round_up(min(ti, _round_up(I, 128)), 128)

    Mp = _round_up(M, tm_eff)
    Ip = _round_up(I, ti_eff)

    # Zero padding is exact: extra rows are discarded; extra intermediate
    # columns give silu(0)*0 = 0 and contribute nothing to the down projection.
    if Mp != M:
        x2 = jnp.pad(x2, ((0, Mp - M), (0, 0)))
    wg, wu, wd = w_gate, w_up, w_down
    if Ip != I:
        wg = jnp.pad(wg, ((0, 0), (0, Ip - I)))
        wu = jnp.pad(wu, ((0, 0), (0, Ip - I)))
        wd = jnp.pad(wd, ((0, Ip - I), (0, 0)))

    # Tile-interleaved gate/up packing: (H, 2*Ip) where the j-th (H, 2*ti)
    # block is [gate_tile_j | up_tile_j]  -> one weight DMA + one matmul/step.
    nI = Ip // ti_eff
    wgu = jnp.concatenate(
        [wg.reshape(H, nI, ti_eff), wu.reshape(H, nI, ti_eff)], axis=2
    ).reshape(H, 2 * Ip)

    grid = (Mp // tm_eff, Ip // ti_eff)

    wbytes = (wgu.size * wgu.dtype.itemsize + wd.size * wd.dtype.itemsize)
    cost = pl.CostEstimate(
        flops=6 * Mp * H * Ip,
        transcendentals=Mp * Ip,
        bytes_accessed=int(x2.size * x2.dtype.itemsize
                           + wbytes * grid[0]
                           + Mp * H * x.dtype.itemsize),
    )

    out = pl.pallas_call(
        functools.partial(_qwen2_mlp_kernel, ti=ti_eff),
        out_shape=jax.ShapeDtypeStruct((Mp, H), x.dtype),
        grid_spec=pltpu.PrefetchScalarGridSpec(
            num_scalar_prefetch=0,
            grid=grid,
            in_specs=[
                pl.BlockSpec((tm_eff, H), lambda i, j: (i, 0)),        # x tile
                pl.BlockSpec((H, 2 * ti_eff), lambda i, j: (0, j)),    # [gate|up]
                pl.BlockSpec((ti_eff, H), lambda i, j: (j, 0)),        # down
            ],
            out_specs=pl.BlockSpec((tm_eff, H), lambda i, j: (i, 0)),
            scratch_shapes=[pltpu.VMEM((tm_eff, H), jnp.float32)],
        ),
        compiler_params=pltpu.CompilerParams(
            dimension_semantics=("parallel", "arbitrary"),
            vmem_limit_bytes=48 * 1024 * 1024),
        cost_estimate=cost,
    )(x2, wgu, wd)

    if Mp != M:
        out = out[:M]
    return out.reshape(B, S, H)


def _reference(x, w_gate, w_up, w_down):
    g = jnp.einsum("bsh,hi->bsi", x, w_gate)
    u = jnp.einsum("bsh,hi->bsi", x, w_up)
    h = jax.nn.silu(g) * u
    return jnp.einsum("bsi,ih->bsh", h, w_down)


if __name__ == "__main__":
    # Small, MLP-consistent shapes: batch=2, seq=8, hidden=32, intermediate=256
    B, S, H, I = 2, 8, 32, 256

    key = jax.random.PRNGKey(0)
    kx, kg, ku, kd = jax.random.split(key, 4)

    x = jax.random.normal(kx, (B, S, H), dtype=jnp.float32)
    # Deterministic synthetic weights, stored as (in_features, out_features).
    w_gate = jax.random.normal(kg, (H, I), dtype=jnp.float32) * 0.05
    w_up = jax.random.normal(ku, (H, I), dtype=jnp.float32) * 0.05
    w_down = jax.random.normal(kd, (I, H), dtype=jnp.float32) * 0.05

    ref = _reference(x, w_gate, w_up, w_down)

    # f32 exactness check (default large tiles get clipped/padded internally).
    out = qwen2_mlp(x, w_gate, w_up, w_down)
    out = jax.block_until_ready(out)
    assert out.shape == (B, S, H)
    assert jnp.allclose(out, ref, atol=1e-4, rtol=1e-4), "f32 mismatch vs reference"

    # bf16 operand path (per perf feedback): halved weight traffic, f32 accum.
    out_bf16 = qwen2_mlp(x.astype(jnp.bfloat16),
                         w_gate.astype(jnp.bfloat16),
                         w_up.astype(jnp.bfloat16),
                         w_down.astype(jnp.bfloat16))
    out_bf16 = jax.block_until_ready(out_bf16)
    assert jnp.allclose(out_bf16.astype(jnp.float32), ref,
                        atol=5e-2, rtol=5e-2), "bf16 mismatch vs reference"

    print("KERNEL_OK")
</pallas_src>

<mosaic_0001>
module attributes {stable_mosaic.version = 11 : i64} {
  func.func @_qwen2_mlp_kernel(%arg0: i32, %arg1: i32, %arg2: memref<16x32xf32, #tpu.memory_space<vmem>>, %arg3: memref<32x512xf32, #tpu.memory_space<vmem>>, %arg4: memref<256x32xf32, #tpu.memory_space<vmem>>, %arg5: memref<16x32xf32, #tpu.memory_space<vmem>>, %arg6: memref<16x32xf32, #tpu.memory_space<vmem>>) attributes {dimension_semantics = [#tpu.dimension_semantics<parallel>, #tpu.dimension_semantics<arbitrary>], iteration_bounds = array<i64: 1, 1>, scalar_prefetch = 0 : i64, scratch_operands = 1 : i64, tpu.core_type = #tpu.core_type<tc>, window_params = [{transform_indices = @transform_0, window_bounds = array<i64: 16, 32>}, {transform_indices = @transform_1, window_bounds = array<i64: 32, 512>}, {transform_indices = @transform_2, window_bounds = array<i64: 256, 32>}, {transform_indices = @transform_3, window_bounds = array<i64: 16, 32>}]} {
    %c0_i32 = arith.constant 0 : i32
    %0 = arith.cmpi eq, %arg1, %c0_i32 : i32
    %1 = arith.extui %0 : i1 to i32
    %c0_i32_0 = arith.constant 0 : i32
    %2 = arith.cmpi ne, %1, %c0_i32_0 : i32
    scf.if %2 {
      %cst_14 = arith.constant 0.000000e+00 : f32
      %23 = vector.broadcast %cst_14 : f32 to vector<16x32xf32>
      %c0_15 = arith.constant 0 : index
      %c0_16 = arith.constant 0 : index
      %24 = vector.load %arg6[%c0_15, %c0_16] : memref<16x32xf32, #tpu.memory_space<vmem>>, vector<16x32xf32>
      tpu.vector_store %arg6[%c0_15, %c0_16], %23 {strides = array<i32>} : memref<16x32xf32, #tpu.memory_space<vmem>>, vector<16x32xf32>,
    } else {
    }
    %c0 = arith.constant 0 : index
    %c0_1 = arith.constant 0 : index
    %3 = vector.load %arg2[%c0, %c0_1] : memref<16x32xf32, #tpu.memory_space<vmem>>, vector<16x32xf32>
    %c0_2 = arith.constant 0 : index
    %c0_3 = arith.constant 0 : index
    %4 = vector.load %arg3[%c0_2, %c0_3] : memref<32x512xf32, #tpu.memory_space<vmem>>, vector<32x512xf32>
    %cst = arith.constant dense<0.000000e+00> : vector<16x512xf32>
    %5 = tpu.matmul %3, %4, %cst {dimension_numbers = #tpu.dot_dimension_numbers<[1], [0], [0], [1], [0, 0, 1, 1], [], []>} : vector<16x32xf32>, vector<32x512xf32>, vector<16x512xf32> -> vector<16x512xf32>
    %6 = vector.extract_strided_slice %5 {offsets = [0, 0], sizes = [16, 256], strides = [1, 1]} : vector<16x512xf32> to vector<16x256xf32>
    %7 = vector.extract_strided_slice %5 {offsets = [0, 256], sizes = [16, 256], strides = [1, 1]} : vector<16x512xf32> to vector<16x256xf32>
    %8 = arith.negf %6 : vector<16x256xf32>
    %9 = math.exp %8 : vector<16x256xf32>
    %cst_4 = arith.constant 1.000000e+00 : f32
    %10 = vector.broadcast %cst_4 : f32 to vector<16x256xf32>
    %11 = arith.addf %10, %9 : vector<16x256xf32>
    %12 = arith.divf %10, %11 : vector<16x256xf32>
    %13 = arith.mulf %6, %12 : vector<16x256xf32>
    %14 = arith.mulf %13, %7 : vector<16x256xf32>
    %c0_5 = arith.constant 0 : index
    %c0_6 = arith.constant 0 : index
    %15 = vector.load %arg6[%c0_5, %c0_6] : memref<16x32xf32, #tpu.memory_space<vmem>>, vector<16x32xf32>
    %c0_7 = arith.constant 0 : index
    %c0_8 = arith.constant 0 : index
    %16 = vector.load %arg4[%c0_7, %c0_8] : memref<256x32xf32, #tpu.memory_space<vmem>>, vector<256x32xf32>
    %cst_9 = arith.constant dense<0.000000e+00> : vector<16x32xf32>
    %17 = tpu.matmul %14, %16, %cst_9 {dimension_numbers = #tpu.dot_dimension_numbers<[1], [0], [0], [1], [0, 0, 1, 1], [], []>} : vector<16x256xf32>, vector<256x32xf32>, vector<16x32xf32> -> vector<16x32xf32>
    %18 = arith.addf %15, %17 : vector<16x32xf32>
    %c0_10 = arith.constant 0 : index
    %c0_11 = arith.constant 0 : index
    %19 = vector.load %arg6[%c0_10, %c0_11] : memref<16x32xf32, #tpu.memory_space<vmem>>, vector<16x32xf32>
    tpu.vector_store %arg6[%c0_10, %c0_11], %18 {strides = array<i32>} : memref<16x32xf32, #tpu.memory_space<vmem>>, vector<16x32xf32>,
    %c0_i32_12 = arith.constant 0 : i32
    %20 = arith.cmpi eq, %arg1, %c0_i32_12 : i32
    %21 = arith.extui %20 : i1 to i32
    %c0_i32_13 = arith.constant 0 : i32
    %22 = arith.cmpi ne, %21, %c0_i32_13 : i32
    scf.if %22 {
      %c0_14 = arith.constant 0 : index
      %c0_15 = arith.constant 0 : index
      %23 = vector.load %arg6[%c0_14, %c0_15] : memref<16x32xf32, #tpu.memory_space<vmem>>, vector<16x32xf32>
      %c0_16 = arith.constant 0 : index
      %c0_17 = arith.constant 0 : index
      %24 = vector.load %arg5[%c0_16, %c0_17] : memref<16x32xf32, #tpu.memory_space<vmem>>, vector<16x32xf32>
      tpu.vector_store %arg5[%c0_16, %c0_17], %23 {strides = array<i32>} : memref<16x32xf32, #tpu.memory_space<vmem>>, vector<16x32xf32>,
    } else {
    }
    return
  }
  func.func @transform_0(%arg0: i32, %arg1: i32) -> (i32, i32) {
    %c0_i32 = arith.constant 0 : i32
    %c0_i32_0 = arith.constant 0 : i32
    return %arg0, %c0_i32 : i32, i32
  }
  func.func @transform_1(%arg0: i32, %arg1: i32) -> (i32, i32) {
    %c0_i32 = arith.constant 0 : i32
    %c0_i32_0 = arith.constant 0 : i32
    return %c0_i32, %arg1 : i32, i32
  }
  func.func @transform_2(%arg0: i32, %arg1: i32) -> (i32, i32) {
    %c0_i32 = arith.constant 0 : i32
    %c0_i32_0 = arith.constant 0 : i32
    return %arg1, %c0_i32 : i32, i32
  }
  func.func @transform_3(%arg0: i32, %arg1: i32) -> (i32, i32) {
    %c0_i32 = arith.constant 0 : i32
    %c0_i32_0 = arith.constant 0 : i32
    return %arg0, %c0_i32 : i32, i32
  }
}

</mosaic_0001>

<llo_original>
// kernel: qwen2_mlp.1
$region0: #{qwen2_mlp.1}
  #allocation0 [shape = 'u32[]', space=smem, size = 0x4, offset = 0x4, fixed_abs, tag = 'smem constant byte address 0x4 - core index']
  #allocation1 [shape = 'u32[144,128]{1,0:T(1,128)}', space=vmem, size = 0x12000, scoped, tag = 'internal scratch']
  #allocation2 [shape = 'f32[16,32]{1,0:T(8,128)}', space=vmem, size = 0x2000, scoped, tag = 'scratch operand']
  %s0 = inlined_call_operand.vmem [shape: f32[16,32], index: 0, kind: input, shape index: {}]
  %s1 = inlined_call_operand.vmem [shape: f32[32,512], index: 1, kind: input, shape index: {}]
  %s2 = inlined_call_operand.vmem [shape: f32[256,32], index: 2, kind: input, shape index: {}]
  %s3 = inlined_call_operand.hbm [shape: f32[16,32], index: 3, kind: output, shape index: {}]
  %s4 = sld [smem:[#allocation0]]
  $region30: #{qwen2_mlp.1} parent=0
    _
  %s6 = ssub.s32 1, %s4
  %s7 = scalar_select 0, %s6, %s4
  $region1: #{qwen2_mlp.1} parent=0
    #allocation3 [shape = 'u8[8192]{0}', space=vmem, size = 0x2000, scoped, tag = 'output window, operand 0, single buffered']
    #allocation4 [shape = 's32[1]{0}', space=sflag, size = 0x4, scoped, tag = 'scoped memory for qwen2_mlp.1']
    %8 = vsyncpa [#allocation4], 0
    // Predicated region
    $region2: #{qwen2_mlp.1} parent=1 // pred_check
      _
    $region3: #{qwen2_mlp.1} parent=1 // pred_check_branch
      %10 = sbr.rel (0) target = $region5
    $region4: #{qwen2_mlp.1} parent=1 // pred_region
      _
    $region5: #{qwen2_mlp.1} parent=1 // pred_fallthru
      _
    // Predicated region
    $region6: #{qwen2_mlp.1} parent=1 // pred_check
      _
    $region7: #{qwen2_mlp.1} parent=1 // pred_check_branch
      %12 = sbr.rel (0) target = $region9
    $region8: #{qwen2_mlp.1} parent=1 // pred_region
      _
    $region9: #{qwen2_mlp.1} parent=1 // pred_fallthru
      _
    // Predicated region
    $region10: #{qwen2_mlp.1} parent=1 // pred_check
      _
    $region11: #{qwen2_mlp.1} parent=1 // pred_check_branch
      %14 = sbr.rel (0) target = $region13
    $region12: #{qwen2_mlp.1} parent=1 // pred_region
      _
    $region13: #{qwen2_mlp.1} parent=1 // pred_fallthru
      _
    %p15 = scmp.eq.s32.totalorder 0, 0
    // Predicated region
    $region14: #{qwen2_mlp.1} parent=1 // pred_check
      %p16 = pneg %p15
    $region15: #{qwen2_mlp.1} parent=1 // pred_check_branch
      %18 = sbr.rel (%p16) target = $region17
    $region16: #{qwen2_mlp.1} parent=1 // pred_region
      %vm19 = vcmask 261120
      %20 = vst.msk [vmem:[#allocation2] sm:$0xff] %vm19, 0.0
      %21 = vst.msk [vmem:[#allocation2 + $0x8] sm:$0xff] %vm19, 0.0
    $region17: #{qwen2_mlp.1} parent=1 // pred_fallthru
      _
    %v22 = vld [vmem:[%s0] sm:$0xff]
    %v23 = vld [vmem:[%s0 + $0x8] sm:$0xff]
    %v24 = vld [vmem:[%s1] sm:$0xff]
    %v25 = vld [vmem:[%s1 + $0x8] sm:$0xff]
    %v26 = vld [vmem:[%s1 + $0x10] sm:$0xff]
    %v27 = vld [vmem:[%s1 + $0x18] sm:$0xff]
    %v28 = vld [vmem:[%s1 + $0x20] sm:$0xff]
    %v29 = vld [vmem:[%s1 + $0x28] sm:$0xff]
    %v30 = vld [vmem:[%s1 + $0x30] sm:$0xff]
    %v31 = vld [vmem:[%s1 + $0x38] sm:$0xff]
    %v32 = vld [vmem:[%s1 + $0x40] sm:$0xff]
    %v33 = vld [vmem:[%s1 + $0x48] sm:$0xff]
    %v34 = vld [vmem:[%s1 + $0x50] sm:$0xff]
    %v35 = vld [vmem:[%s1 + $0x58] sm:$0xff]
    %v36 = vld [vmem:[%s1 + $0x60] sm:$0xff]
    %v37 = vld [vmem:[%s1 + $0x68] sm:$0xff]
    %v38 = vld [vmem:[%s1 + $0x70] sm:$0xff]
    %v39 = vld [vmem:[%s1 + $0x78] sm:$0xff]
    %vm40 = vcmask 261120
    %v42 = vsel %vm40, %v22, 0
    %v45 = vsel %vm40, %v23, 0
    %47 = vmatprep.subr.mxu0 %v25
    %48 = vmatpush1.msra.mxu0 %v24
    %49 = vmatprep.subr.mxu0 %v29
    %50 = vmatpush1.msra.mxu0 %v28
    %51 = vmatprep.subr.mxu0 %v33
    %52 = vmatpush1.msra.mxu0 %v32
    %53 = vmatprep.subr.mxu0 %v37
    %54 = vmatpush1.msra.mxu0 %v36
    %55 = vmatprep.subr.mxu0 0.0
    %56 = vmatpush1.msra.mxu0 0.0
    %57 = vmatprep.subr.mxu0 0.0
    %58 = vmatpush1.msra.mxu0 0.0
    %59 = vmatprep.subr.mxu0 0.0
    %60 = vmatpush1.msra.mxu0 0.0
    %61 = vmatprep.subr.mxu0 0.0
    %62 = vmatpush1.msra.mxu0 0.0
    %63 = vmatprep.subr.mxu0 0.0
    %64 = vmatpush1.msra.mxu0 0.0
    %65 = vmatprep.subr.mxu0 0.0
    %66 = vmatpush1.msra.mxu0 0.0
    %67 = vmatprep.subr.mxu0 0.0
    %68 = vmatpush1.msra.mxu0 0.0
    %69 = vmatprep.subr.mxu0 0.0
    %70 = vmatpush1.msra.mxu0 0.0
    %71 = vmatprep.subr.mxu0 0.0
    %72 = vmatpush1.msra.mxu0 0.0
    %73 = vmatprep.subr.mxu0 0.0
    %74 = vmatpush1.msra.mxu0 0.0
    %75 = vmatprep.subr.mxu0 0.0
    %76 = vmatpush1.msra.mxu0 0.0
    %77 = vmatprep.subr.mxu0 0.0
    %78 = vmatpush1.msra.mxu0 0.0
    %79 = vmatprep.subr.mxu0 0.0
    %80 = vmatpush1.msra.mxu0 0.0
    %81 = vmatprep.subr.mxu0 0.0
    %82 = vmatpush1.msra.mxu0 0.0
    %83 = vmatprep.subr.mxu0 0.0
    %84 = vmatpush1.msra.mxu0 0.0
    %85 = vmatprep.subr.mxu0 0.0
    %86 = vmatpush1.msra.mxu0 0.0
    %87 = vmatprep.subr.mxu0 0.0
    %88 = vmatpush1.msra.mxu0 0.0
    %89 = vmatprep.subr.mxu0 0.0
    %90 = vmatpush1.msra.mxu0 0.0
    %91 = vmatprep.subr.mxu0 0.0
    %92 = vmatpush1.msra.mxu0 0.0
    %93 = vmatprep.subr.mxu0 0.0
    %94 = vmatpush1.msra.mxu0 0.0
    %95 = vmatprep.subr.mxu0 0.0
    %96 = vmatpush1.msra.mxu0 0.0
    %97 = vmatprep.subr.mxu0 0.0
    %98 = vmatpush1.msra.mxu0 0.0
    %99 = vmatprep.subr.mxu0 0.0
    %100 = vmatpush1.msra.mxu0 0.0
    %101 = vmatprep.subr.mxu0 0.0
    %102 = vmatpush1.msra.mxu0 0.0
    %103 = vmatprep.subr.mxu0 0.0
    %104 = vmatpush1.msra.mxu0 0.0
    %105 = vmatprep.subr.mxu0 0.0
    %106 = vmatpush1.msra.mxu0 0.0
    %107 = vmatprep.subr.mxu0 0.0
    %108 = vmatpush1.msra.mxu0 0.0
    %109 = vmatprep.subr.mxu0 0.0
    %110 = vmatpush1.msra.mxu0 0.0
    %111 = vmatprep.mubr.f32.mxu0 0.0
    %112 = vmatmul.mubr.f32.gmra.mrb[0].mxu0 %v42
    %v113 = vpop.f32.mrb[0].mxu0
    %v114 = vadd.f32 0.0, %v113
    %v115 = vpop.f32.mrb[0].mxu0
    %v116 = vadd.f32 0.0, %v115
    %117 = vmatprep.mubr.f32.mxu0 0.0
    %118 = vmatmul.mubr.f32.gmra.mrb[0].mxu0 %v45
    %v119 = vpop.f32.mrb[0].mxu0
    %v120 = vadd.f32 0.0, %v119
    %v121 = vpop.f32.mrb[0].mxu0
    %v122 = vadd.f32 0.0, %v121
    %123 = vdwg.mxu0
    %124 = vmatprep.subr.mxu0 %v27
    %125 = vmatpush1.msra.mxu0 %v26
    %126 = vmatprep.subr.mxu0 %v31
    %127 = vmatpush1.msra.mxu0 %v30
    %128 = vmatprep.subr.mxu0 %v35
    %129 = vmatpush1.msra.mxu0 %v34
    %130 = vmatprep.subr.mxu0 %v39
    %131 = vmatpush1.msra.mxu0 %v38
    %132 = vmatprep.subr.mxu0 0.0
    %133 = vmatpush1.msra.mxu0 0.0
    %134 = vmatprep.subr.mxu0 0.0
    %135 = vmatpush1.msra.mxu0 0.0
    %136 = vmatprep.subr.mxu0 0.0
    %137 = vmatpush1.msra.mxu0 0.0
    %138 = vmatprep.subr.mxu0 0.0
    %139 = vmatpush1.msra.mxu0 0.0
    %140 = vmatprep.subr.mxu0 0.0
    %141 = vmatpush1.msra.mxu0 0.0
    %142 = vmatprep.subr.mxu0 0.0
    %143 = vmatpush1.msra.mxu0 0.0
    %144 = vmatprep.subr.mxu0 0.0
    %145 = vmatpush1.msra.mxu0 0.0
    %146 = vmatprep.subr.mxu0 0.0
    %147 = vmatpush1.msra.mxu0 0.0
    %148 = vmatprep.subr.mxu0 0.0
    %149 = vmatpush1.msra.mxu0 0.0
    %150 = vmatprep.subr.mxu0 0.0
    %151 = vmatpush1.msra.mxu0 0.0
    %152 = vmatprep.subr.mxu0 0.0
    %153 = vmatpush1.msra.mxu0 0.0
    %154 = vmatprep.subr.mxu0 0.0
    %155 = vmatpush1.msra.mxu0 0.0
    %156 = vmatprep.subr.mxu0 0.0
    %157 = vmatpush1.msra.mxu0 0.0
    %158 = vmatprep.subr.mxu0 0.0
    %159 = vmatpush1.msra.mxu0 0.0
    %160 = vmatprep.subr.mxu0 0.0
    %161 = vmatpush1.msra.mxu0 0.0
    %162 = vmatprep.subr.mxu0 0.0
    %163 = vmatpush1.msra.mxu0 0.0
    %164 = vmatprep.subr.mxu0 0.0
    %165 = vmatpush1.msra.mxu0 0.0
    %166 = vmatprep.subr.mxu0 0.0
    %167 = vmatpush1.msra.mxu0 0.0
    %168 = vmatprep.subr.mxu0 0.0
    %169 = vmatpush1.msra.mxu0 0.0
    %170 = vmatprep.subr.mxu0 0.0
    %171 = vmatpush1.msra.mxu0 0.0
    %172 = vmatprep.subr.mxu0 0.0
    %173 = vmatpush1.msra.mxu0 0.0
    %174 = vmatprep.subr.mxu0 0.0
    %175 = vmatpush1.msra.mxu0 0.0
    %176 = vmatprep.subr.mxu0 0.0
    %177 = vmatpush1.msra.mxu0 0.0
    %178 = vmatprep.subr.mxu0 0.0
    %179 = vmatpush1.msra.mxu0 0.0
    %180 = vmatprep.subr.mxu0 0.0
    %181 = vmatpush1.msra.mxu0 0.0
    %182 = vmatprep.subr.mxu0 0.0
    %183 = vmatpush1.msra.mxu0 0.0
    %184 = vmatprep.subr.mxu0 0.0
    %185 = vmatpush1.msra.mxu0 0.0
    %186 = vmatprep.subr.mxu0 0.0
    %187 = vmatpush1.msra.mxu0 0.0
    %188 = vmatprep.mubr.f32.mxu0 0.0
    %189 = vmatmul.mubr.f32.gmra.mrb[0].mxu0 %v42
    %v190 = vpop.f32.mrb[0].mxu0
    %v191 = vadd.f32 0.0, %v190
    %v192 = vpop.f32.mrb[0].mxu0
    %v193 = vadd.f32 0.0, %v192
    %194 = vmatprep.mubr.f32.mxu0 0.0
    %195 = vmatmul.mubr.f32.gmra.mrb[0].mxu0 %v45
    %v196 = vpop.f32.mrb[0].mxu0
    %v197 = vadd.f32 0.0, %v196
    %v198 = vpop.f32.mrb[0].mxu0
    %v199 = vadd.f32 0.0, %v198
    %200 = vdwg.mxu0
    %v201 = vxor.u32 %v114, 2147483648
    %v202 = vxor.u32 %v116, 2147483648
    %v203 = vxor.u32 %v120, 2147483648
    %v204 = vxor.u32 %v122, 2147483648
    %v205 = vmul.f32 %v201, 1.442695
    %v206 = vpow.pop %v205
    %v207 = vmul.f32 %v202, 1.442695
    %v208 = vpow.pop %v207
    %v209 = vmul.f32 %v203, 1.442695
    %v210 = vpow.pop %v209
    %v211 = vmul.f32 %v204, 1.442695
    %v212 = vpow.pop %v211
    %v213 = vadd.f32 %v206, 1.0
    %v214 = vadd.f32 %v208, 1.0
    %v215 = vadd.f32 %v210, 1.0
    %v216 = vadd.f32 %v212, 1.0
    %v217 = vrcp.pop %v213
    %v218 = vmul.f32 1.0, %v217
    %v219 = vrcp.pop %v214
    %v220 = vmul.f32 1.0, %v219
    %v221 = vrcp.pop %v215
    %v222 = vmul.f32 1.0, %v221
    %v223 = vrcp.pop %v216
    %v224 = vmul.f32 1.0, %v223
    %v225 = vmul.f32 %v114, %v218
    %v226 = vmul.f32 %v116, %v220
    %v227 = vmul.f32 %v120, %v222
    %v228 = vmul.f32 %v122, %v224
    %v229 = vmul.f32 %v225, %v191
    %v230 = vmul.f32 %v226, %v193
    %v231 = vmul.f32 %v227, %v197
    %v232 = vmul.f32 %v228, %v199
    %v233 = vld [vmem:[#allocation2] sm:$0xff]
    %v234 = vld [vmem:[#allocation2 + $0x8] sm:$0xff]
    %v235 = vld [vmem:[%s2] sm:$0xff]
    %v236 = vld [vmem:[%s2 + $0x8] sm:$0xff]
    %v237 = vld [vmem:[%s2 + $0x10] sm:$0xff]
    %v238 = vld [vmem:[%s2 + $0x18] sm:$0xff]
    %v239 = vld [vmem:[%s2 + $0x20] sm:$0xff]
    %v240 = vld [vmem:[%s2 + $0x28] sm:$0xff]
    %v241 = vld [vmem:[%s2 + $0x30] sm:$0xff]
    %v242 = vld [vmem:[%s2 + $0x38] sm:$0xff]
    %v243 = vld [vmem:[%s2 + $0x40] sm:$0xff]
    %v244 = vld [vmem:[%s2 + $0x48] sm:$0xff]
    %v245 = vld [vmem:[%s2 + $0x50] sm:$0xff]
    %v246 = vld [vmem:[%s2 + $0x58] sm:$0xff]
    %v247 = vld [vmem:[%s2 + $0x60] sm:$0xff]
    %v248 = vld [vmem:[%s2 + $0x68] sm:$0xff]
    %v249 = vld [vmem:[%s2 + $0x70] sm:$0xff]
    %v250 = vld [vmem:[%s2 + $0x78] sm:$0xff]
    %v251 = vld [vmem:[%s2 + $0x80] sm:$0xff]
    %v252 = vld [vmem:[%s2 + $0x88] sm:$0xff]
    %v253 = vld [vmem:[%s2 + $0x90] sm:$0xff]
    %v254 = vld [vmem:[%s2 + $0x98] sm:$0xff]
    %v255 = vld [vmem:[%s2 + $0xa0] sm:$0xff]
    %v256 = vld [vmem:[%s2 + $0xa8] sm:$0xff]
    %v257 = vld [vmem:[%s2 + $0xb0] sm:$0xff]
    %v258 = vld [vmem:[%s2 + $0xb8] sm:$0xff]
    %v259 = vld [vmem:[%s2 + $0xc0] sm:$0xff]
    %v260 = vld [vmem:[%s2 + $0xc8] sm:$0xff]
    %v261 = vld [vmem:[%s2 + $0xd0] sm:$0xff]
    %v262 = vld [vmem:[%s2 + $0xd8] sm:$0xff]
    %v263 = vld [vmem:[%s2 + $0xe0] sm:$0xff]
    %v264 = vld [vmem:[%s2 + $0xe8] sm:$0xff]
    %v265 = vld [vmem:[%s2 + $0xf0] sm:$0xff]
    %v266 = vld [vmem:[%s2 + $0xf8] sm:$0xff]
    %267 = vmatprep.subr.mxu0 0.0
    %268 = vmatpush1.msra.mxu0 %v235
    %269 = vmatprep.subr.mxu0 0.0
    %270 = vmatpush1.msra.mxu0 %v236
    %271 = vmatprep.subr.mxu0 0.0
    %272 = vmatpush1.msra.mxu0 %v237
    %273 = vmatprep.subr.mxu0 0.0
    %274 = vmatpush1.msra.mxu0 %v238
    %275 = vmatprep.subr.mxu0 0.0
    %276 = vmatpush1.msra.mxu0 %v239
    %277 = vmatprep.subr.mxu0 0.0
    %278 = vmatpush1.msra.mxu0 %v240
    %279 = vmatprep.subr.mxu0 0.0
    %280 = vmatpush1.msra.mxu0 %v241
    %281 = vmatprep.subr.mxu0 0.0
    %282 = vmatpush1.msra.mxu0 %v242
    %283 = vmatprep.subr.mxu0 0.0
    %284 = vmatpush1.msra.mxu0 %v243
    %285 = vmatprep.subr.mxu0 0.0
    %286 = vmatpush1.msra.mxu0 %v244
    %287 = vmatprep.subr.mxu0 0.0
    %288 = vmatpush1.msra.mxu0 %v245
    %289 = vmatprep.subr.mxu0 0.0
    %290 = vmatpush1.msra.mxu0 %v246
    %291 = vmatprep.subr.mxu0 0.0
    %292 = vmatpush1.msra.mxu0 %v247
    %293 = vmatprep.subr.mxu0 0.0
    %294 = vmatpush1.msra.mxu0 %v248
    %295 = vmatprep.subr.mxu0 0.0
    %296 = vmatpush1.msra.mxu0 %v249
    %297 = vmatprep.subr.mxu0 0.0
    %298 = vmatpush1.msra.mxu0 %v250
    %299 = vmatprep.subr.mxu0 0.0
    %300 = vmatpush1.msra.mxu0 %v251
    %301 = vmatprep.subr.mxu0 0.0
    %302 = vmatpush1.msra.mxu0 %v252
    %303 = vmatprep.subr.mxu0 0.0
    %304 = vmatpush1.msra.mxu0 %v253
    %305 = vmatprep.subr.mxu0 0.0
    %306 = vmatpush1.msra.mxu0 %v254
    %307 = vmatprep.subr.mxu0 0.0
    %308 = vmatpush1.msra.mxu0 %v255
    %309 = vmatprep.subr.mxu0 0.0
    %310 = vmatpush1.msra.mxu0 %v256
    %311 = vmatprep.subr.mxu0 0.0
    %312 = vmatpush1.msra.mxu0 %v257
    %313 = vmatprep.subr.mxu0 0.0
    %314 = vmatpush1.msra.mxu0 %v258
    %315 = vmatprep.subr.mxu0 0.0
    %316 = vmatpush1.msra.mxu0 %v259
    %317 = vmatprep.subr.mxu0 0.0
    %318 = vmatpush1.msra.mxu0 %v260
    %319 = vmatprep.subr.mxu0 0.0
    %320 = vmatpush1.msra.mxu0 %v261
    %321 = vmatprep.subr.mxu0 0.0
    %322 = vmatpush1.msra.mxu0 %v262
    %323 = vmatprep.subr.mxu0 0.0
    %324 = vmatpush1.msra.mxu0 %v263
    %325 = vmatprep.subr.mxu0 0.0
    %326 = vmatpush1.msra.mxu0 %v264
    %327 = vmatprep.subr.mxu0 0.0
    %328 = vmatpush1.msra.mxu0 %v265
    %329 = vmatprep.subr.mxu0 0.0
    %330 = vmatpush1.msra.mxu0 %v266
    %331 = vmatprep.mubr.f32.mxu0 %v230
    %332 = vmatmul.mubr.f32.gmra.mrb[0].mxu0 %v229
    %v333 = vpop.f32.mrb[0].mxu0
    %v334 = vadd.f32 0.0, %v333
    %v335 = vpop.f32.mrb[0].mxu0
    %336 = vmatprep.mubr.f32.mxu0 %v232
    %337 = vmatmul.mubr.f32.gmra.mrb[0].mxu0 %v231
    %v338 = vpop.f32.mrb[0].mxu0
    %v339 = vadd.f32 0.0, %v338
    %v340 = vpop.f32.mrb[0].mxu0
    %341 = vdwg.mxu0
    %v342 = vadd.f32 %v233, %v334
    %v343 = vadd.f32 %v234, %v339
    %344 = vst.msk [vmem:[#allocation2] sm:$0xff] %vm40, %v342
    %345 = vst.msk [vmem:[#allocation2 + $0x8] sm:$0xff] %vm40, %v343
    // Predicated region
    $region18: #{qwen2_mlp.1} parent=1 // pred_check
      %p346 = pneg %p15
    $region19: #{qwen2_mlp.1} parent=1 // pred_check_branch
      %348 = sbr.rel (%p346) target = $region21
    $region20: #{qwen2_mlp.1} parent=1 // pred_region
      %v349 = vld [vmem:[#allocation2] sm:$0xff]
      %v350 = vld [vmem:[#allocation2 + $0x8] sm:$0xff]
      %351 = vst.msk [vmem:[#allocation3] sm:$0xff] %vm40, %v349
      %352 = vst.msk [vmem:[#allocation3 + $0x8] sm:$0xff] %vm40, %v350
    $region21: #{qwen2_mlp.1} parent=1 // pred_fallthru
      _
    // Predicated region
    $region22: #{qwen2_mlp.1} parent=1 // pred_check
      _
    $region23: #{qwen2_mlp.1} parent=1 // pred_check_branch
      %354 = sbr.rel (0) target = $region25
    $region24: #{qwen2_mlp.1} parent=1 // pred_region
      %s356 = ssub.s32 256, 256
      %357 = vsyncadd [#allocation4], %s356
      %s358 = sshll.u32 [#allocation3], 4
      %s359 = int_to_ptr.vmem [resolvable:$true] %s358
      %364 = dma.vmem_to_hbm [thread:$0]  %s359, 256, %s3, [#allocation4], 128, 128, 8
    $region25: #{qwen2_mlp.1} parent=1 // pred_fallthru
      _
    // Predicated region
    $region26: #{qwen2_mlp.1} parent=1 // pred_check
      _
    $region27: #{qwen2_mlp.1} parent=1 // pred_check_branch
      %366 = sbr.rel (0) target = $region29
    $region28: #{qwen2_mlp.1} parent=1 // pred_region
      %367 = dma.done [#allocation4], 256
    $region29: #{qwen2_mlp.1} parent=1 // pred_fallthru
      _
    %368 = vsyncpa [#allocation4], 1

</llo_original>
